<compile_context>
chip_gen: v7x
topology: tpu7x:2x2x1
jax: 0.10.0
libtpu: 0.0.40
codegen_flags: <defaults>
</compile_context>

<pallas_src>
import functools

import jax
import jax.numpy as jnp
from jax import lax
from jax.experimental import pallas as pl
from jax.experimental.pallas import tpu as pltpu


def _channel_attention_kernel(x_ref, w1t_ref, w2t_ref, o_ref,
                              sum_acc, max_acc, *, hw_total, inv_hw):
    # x_ref   : (tb, C, t_hw)  spatial tile of the flattened input
    # w1t_ref : (C, C_r)       conv1 weight, pre-transposed
    # w2t_ref : (C_r, C)       conv2 weight, pre-transposed
    # o_ref   : (tb, C)        attention logits -> sigmoid
    # sum_acc / max_acc : (tb, C, t_hw) f32 running elementwise accumulators
    k = pl.program_id(1)
    n_k = pl.num_programs(1)
    t_hw = x_ref.shape[-1]

    @pl.when(k == 0)
    def _init():
        sum_acc[...] = jnp.zeros_like(sum_acc)
        max_acc[...] = jnp.full_like(max_acc, -jnp.inf)

    x = x_ref[...].astype(jnp.float32)

    if hw_total % t_hw != 0:
        # Remainder tile(s): mask out-of-range lanes (0 for sum, -inf for max).
        lane = lax.broadcasted_iota(jnp.int32, x.shape, 2)
        valid = (k * t_hw + lane) < hw_total
        x_s = jnp.where(valid, x, 0.0)
        x_m = jnp.where(valid, x, -jnp.inf)
    else:
        x_s = x
        x_m = x

    # Elementwise accumulation (VPU only); cross-lane reduce deferred to finalize.
    sum_acc[...] = sum_acc[...] + x_s
    max_acc[...] = jnp.maximum(max_acc[...], x_m)

    @pl.when(k == n_k - 1)
    def _finalize():
        avg_pool = jnp.sum(sum_acc[...], axis=-1) * inv_hw        # (tb, C)
        max_pool = jnp.max(max_acc[...], axis=-1)                 # (tb, C)
        # Stack both branches into one MLP pass: (2*tb, C).
        p = jnp.concatenate([avg_pool, max_pool], axis=0)
        h = jnp.dot(p, w1t_ref[...].astype(jnp.float32),
                    preferred_element_type=jnp.float32)           # (2*tb, C_r)
        h = jnp.maximum(h, 0.0)
        y = jnp.dot(h, w2t_ref[...].astype(jnp.float32),
                    preferred_element_type=jnp.float32)           # (2*tb, C)
        tb = o_ref.shape[0]
        out = y[:tb] + y[tb:]
        o_ref[...] = jax.nn.sigmoid(out).astype(o_ref.dtype)


def channel_attention(x, w1, w2, *, t_hw=None, tile_bytes=2 * 1024 * 1024):
    """ChannelAttention forward.

    x  : (B, C, H, W)
    w1 : (C_r, C)  == PyTorch Conv2d(C, C_r, 1, bias=False).weight[:, :, 0, 0]
    w2 : (C, C_r)  == PyTorch Conv2d(C_r, C, 1, bias=False).weight[:, :, 0, 0]
    Returns sigmoid(fc(avg_pool(x)) + fc(max_pool(x))) of shape (B, C, 1, 1).
    """
    B, C, H, W = x.shape
    HW = H * W
    x_flat = x.reshape(B, C, HW)

    # Pre-transpose the tiny weights once in the wrapper (no in-kernel .T).
    w1t = jnp.asarray(w1).T            # (C, C_r)
    w2t = jnp.asarray(w2).T            # (C_r, C)

    # Batch tile: split into chunks of 8 when possible (enables megacore
    # sharding of the parallel batch axis); otherwise a full-dim block.
    tb = 8 if (B % 8 == 0 and B > 8) else B

    # Spatial tile: multiple of 128 lanes, ~2 MiB per buffer (double-buffered
    # input + 2 accumulator scratches stay well under scoped VMEM on v5e/v6e/v7x).
    itemsize = jnp.dtype(x.dtype).itemsize
    if HW <= 128:
        t_hw = HW                      # full-dim block is always legal
    else:
        if t_hw is None:
            t_hw = tile_bytes // max(1, tb * C * itemsize)
        t_hw = max(128, (t_hw // 128) * 128)
        t_hw = min(t_hw, pl.cdiv(HW, 128) * 128)

    n_b = pl.cdiv(B, tb)
    n_k = pl.cdiv(HW, t_hw)

    kernel = functools.partial(
        _channel_attention_kernel, hw_total=HW, inv_hw=1.0 / HW)

    out = pl.pallas_call(
        kernel,
        out_shape=jax.ShapeDtypeStruct((B, C), x.dtype),
        grid_spec=pltpu.PrefetchScalarGridSpec(
            num_scalar_prefetch=0,
            grid=(n_b, n_k),
            in_specs=[
                pl.BlockSpec((tb, C, t_hw), lambda b, k: (b, 0, k)),
                pl.BlockSpec(w1t.shape, lambda b, k: (0, 0)),   # resident
                pl.BlockSpec(w2t.shape, lambda b, k: (0, 0)),   # resident
            ],
            out_specs=pl.BlockSpec((tb, C), lambda b, k: (b, 0)),
            scratch_shapes=[
                pltpu.VMEM((tb, C, t_hw), jnp.float32),   # running sum
                pltpu.VMEM((tb, C, t_hw), jnp.float32),   # running max
            ],
        ),
        compiler_params=pltpu.CompilerParams(
            dimension_semantics=("parallel", "arbitrary")),
    )(x_flat, w1t, w2t)

    return out.reshape(B, C, 1, 1)


if __name__ == "__main__":
    # Module hardcodes hidden = in_planes // 16, so use C >= 16.
    # H = W = 20 -> HW = 400: with t_hw=128 this exercises the multi-step
    # spatial reduction *and* the masked remainder tile.
    B, C, H, W = 2, 32, 20, 20
    C_r = C // 16

    key = jax.random.PRNGKey(0)
    kx, k1, k2 = jax.random.split(key, 3)
    x = jax.random.normal(kx, (B, C, H, W), dtype=jnp.float32)
    # Deterministic "Conv2d 1x1, bias=False" weights: (out_ch, in_ch)
    w1 = jax.random.normal(k1, (C_r, C), dtype=jnp.float32) * 0.1
    w2 = jax.random.normal(k2, (C, C_r), dtype=jnp.float32) * 0.1

    out = channel_attention(x, w1, w2, t_hw=128)
    jax.block_until_ready(out)

    # Reference check in plain JAX (same math as the PyTorch forward).
    avg = jnp.mean(x, axis=(2, 3))
    mx = jnp.max(x, axis=(2, 3))
    fc = lambda p: jnp.maximum(p @ w1.T, 0.0) @ w2.T
    ref = jax.nn.sigmoid(fc(avg) + fc(mx)).reshape(B, C, 1, 1)
    assert jnp.allclose(out, ref, atol=1e-5, rtol=1e-5), "mismatch vs reference"

    print("KERNEL_OK")
</pallas_src>

<mosaic_0001>
module attributes {stable_mosaic.version = 11 : i64} {
  func.func @_channel_attention_kernel(%arg0: i32, %arg1: i32, %arg2: memref<2x32x128xf32, #tpu.memory_space<vmem>>, %arg3: memref<32x2xf32, #tpu.memory_space<vmem>>, %arg4: memref<2x32xf32, #tpu.memory_space<vmem>>, %arg5: memref<2x32xf32, #tpu.memory_space<vmem>>, %arg6: memref<2x32x128xf32, #tpu.memory_space<vmem>>, %arg7: memref<2x32x128xf32, #tpu.memory_space<vmem>>) attributes {dimension_semantics = [#tpu.dimension_semantics<parallel>, #tpu.dimension_semantics<arbitrary>], iteration_bounds = array<i64: 1, 4>, scalar_prefetch = 0 : i64, scratch_operands = 2 : i64, tpu.core_type = #tpu.core_type<tc>, window_params = [{transform_indices = @transform_0, window_bounds = array<i64: 2, 32, 128>}, {pipeline_mode = #tpu.pipeline_mode<synchronous>, transform_indices = @transform_1, window_bounds = array<i64: 32, 2>}, {pipeline_mode = #tpu.pipeline_mode<synchronous>, transform_indices = @transform_2, window_bounds = array<i64: 2, 32>}, {transform_indices = @transform_3, window_bounds = array<i64: 2, 32>}]} {
    %c0_i32 = arith.constant 0 : i32
    %0 = arith.cmpi eq, %arg1, %c0_i32 : i32
    %1 = arith.extui %0 : i1 to i32
    %c0_i32_0 = arith.constant 0 : i32
    %2 = arith.cmpi ne, %1, %c0_i32_0 : i32
    scf.if %2 {
      %cst_17 = arith.constant 0.000000e+00 : f32
      %23 = vector.broadcast %cst_17 : f32 to vector<2x32x128xf32>
      %c0_18 = arith.constant 0 : index
      %c0_19 = arith.constant 0 : index
      %c0_20 = arith.constant 0 : index
      %24 = vector.load %arg6[%c0_18, %c0_19, %c0_20] : memref<2x32x128xf32, #tpu.memory_space<vmem>>, vector<2x32x128xf32>
      tpu.vector_store %arg6[%c0_18, %c0_19, %c0_20], %23 {strides = array<i32>} : memref<2x32x128xf32, #tpu.memory_space<vmem>>, vector<2x32x128xf32>,
      %cst_21 = arith.constant 0xFF800000 : f32
      %25 = vector.broadcast %cst_21 : f32 to vector<2x32x128xf32>
      %c0_22 = arith.constant 0 : index
      %c0_23 = arith.constant 0 : index
      %c0_24 = arith.constant 0 : index
      %26 = vector.load %arg7[%c0_22, %c0_23, %c0_24] : memref<2x32x128xf32, #tpu.memory_space<vmem>>, vector<2x32x128xf32>
      tpu.vector_store %arg7[%c0_22, %c0_23, %c0_24], %25 {strides = array<i32>} : memref<2x32x128xf32, #tpu.memory_space<vmem>>, vector<2x32x128xf32>,
    } else {
    }
    %c0 = arith.constant 0 : index
    %c0_1 = arith.constant 0 : index
    %c0_2 = arith.constant 0 : index
    %3 = vector.load %arg2[%c0, %c0_1, %c0_2] : memref<2x32x128xf32, #tpu.memory_space<vmem>>, vector<2x32x128xf32>
    %4 = tpu.iota {dimensions = array<i32: 2>} : vector<2x32x128xi32>
    %c128_i32 = arith.constant 128 : i32
    %5 = arith.muli %arg1, %c128_i32 : i32
    %6 = vector.broadcast %5 : i32 to vector<2x32x128xi32>
    %7 = arith.addi %6, %4 : vector<2x32x128xi32>
    %c400_i32 = arith.constant 400 : i32
    %8 = vector.broadcast %c400_i32 : i32 to vector<2x32x128xi32>
    %9 = arith.cmpi slt, %7, %8 : vector<2x32x128xi32>
    %cst = arith.constant 0.000000e+00 : f32
    %10 = vector.broadcast %cst : f32 to vector<2x32x128xf32>
    %11 = arith.select %9, %3, %10 : vector<2x32x128xi1>, vector<2x32x128xf32>
    %cst_3 = arith.constant 0xFF800000 : f32
    %12 = vector.broadcast %cst_3 : f32 to vector<2x32x128xf32>
    %13 = arith.select %9, %3, %12 : vector<2x32x128xi1>, vector<2x32x128xf32>
    %c0_4 = arith.constant 0 : index
    %c0_5 = arith.constant 0 : index
    %c0_6 = arith.constant 0 : index
    %14 = vector.load %arg6[%c0_4, %c0_5, %c0_6] : memref<2x32x128xf32, #tpu.memory_space<vmem>>, vector<2x32x128xf32>
    %15 = arith.addf %14, %11 : vector<2x32x128xf32>
    %c0_7 = arith.constant 0 : index
    %c0_8 = arith.constant 0 : index
    %c0_9 = arith.constant 0 : index
    %16 = vector.load %arg6[%c0_7, %c0_8, %c0_9] : memref<2x32x128xf32, #tpu.memory_space<vmem>>, vector<2x32x128xf32>
    tpu.vector_store %arg6[%c0_7, %c0_8, %c0_9], %15 {strides = array<i32>} : memref<2x32x128xf32, #tpu.memory_space<vmem>>, vector<2x32x128xf32>,
    %c0_10 = arith.constant 0 : index
    %c0_11 = arith.constant 0 : index
    %c0_12 = arith.constant 0 : index
    %17 = vector.load %arg7[%c0_10, %c0_11, %c0_12] : memref<2x32x128xf32, #tpu.memory_space<vmem>>, vector<2x32x128xf32>
    %18 = arith.maximumf %17, %13 : vector<2x32x128xf32>
    %c0_13 = arith.constant 0 : index
    %c0_14 = arith.constant 0 : index
    %c0_15 = arith.constant 0 : index
    %19 = vector.load %arg7[%c0_13, %c0_14, %c0_15] : memref<2x32x128xf32, #tpu.memory_space<vmem>>, vector<2x32x128xf32>
    tpu.vector_store %arg7[%c0_13, %c0_14, %c0_15], %18 {strides = array<i32>} : memref<2x32x128xf32, #tpu.memory_space<vmem>>, vector<2x32x128xf32>,
    %c3_i32 = arith.constant 3 : i32
    %20 = arith.cmpi eq, %arg1, %c3_i32 : i32
    %21 = arith.extui %20 : i1 to i32
    %c0_i32_16 = arith.constant 0 : i32
    %22 = arith.cmpi ne, %21, %c0_i32_16 : i32
    scf.if %22 {
      %c0_17 = arith.constant 0 : index
      %c0_18 = arith.constant 0 : index
      %c0_19 = arith.constant 0 : index
      %23 = vector.load %arg6[%c0_17, %c0_18, %c0_19] : memref<2x32x128xf32, #tpu.memory_space<vmem>>, vector<2x32x128xf32>
      %cst_20 = arith.constant dense<0.000000e+00> : vector<2x32xf32>
      %24 = vector.multi_reduction <add>, %23, %cst_20 [2] : vector<2x32x128xf32> to vector<2x32xf32>
      %cst_21 = arith.constant 2.500000e-03 : f32
      %25 = vector.broadcast %cst_21 : f32 to vector<2x32xf32>
      %26 = arith.mulf %24, %25 : vector<2x32xf32>
      %c0_22 = arith.constant 0 : index
      %c0_23 = arith.constant 0 : index
      %c0_24 = arith.constant 0 : index
      %27 = vector.load %arg7[%c0_22, %c0_23, %c0_24] : memref<2x32x128xf32, #tpu.memory_space<vmem>>, vector<2x32x128xf32>
      %cst_25 = arith.constant dense<0xFF800000> : vector<2x32xf32>
      %28 = vector.multi_reduction <maximumf>, %27, %cst_25 [2] : vector<2x32x128xf32> to vector<2x32xf32>
      %29 = tpu.concatenate %26, %28 in 0 : vector<2x32xf32>, vector<2x32xf32> -> vector<4x32xf32>
      %c0_26 = arith.constant 0 : index
      %c0_27 = arith.constant 0 : index
      %30 = vector.load %arg3[%c0_26, %c0_27] : memref<32x2xf32, #tpu.memory_space<vmem>>, vector<32x2xf32>
      %cst_28 = arith.constant dense<0.000000e+00> : vector<4x2xf32>
      %31 = tpu.matmul %29, %30, %cst_28 {dimension_numbers = #tpu.dot_dimension_numbers<[1], [0], [0], [1], [0, 0, 1, 1], [], []>} : vector<4x32xf32>, vector<32x2xf32>, vector<4x2xf32> -> vector<4x2xf32>
      %cst_29 = arith.constant 0.000000e+00 : f32
      %32 = vector.broadcast %cst_29 : f32 to vector<4x2xf32>
      %33 = arith.maximumf %31, %32 : vector<4x2xf32>
      %c0_30 = arith.constant 0 : index
      %c0_31 = arith.constant 0 : index
      %34 = vector.load %arg4[%c0_30, %c0_31] : memref<2x32xf32, #tpu.memory_space<vmem>>, vector<2x32xf32>
      %cst_32 = arith.constant dense<0.000000e+00> : vector<4x32xf32>
      %35 = tpu.matmul %33, %34, %cst_32 {dimension_numbers = #tpu.dot_dimension_numbers<[1], [0], [0], [1], [0, 0, 1, 1], [], []>} : vector<4x2xf32>, vector<2x32xf32>, vector<4x32xf32> -> vector<4x32xf32>
      %36 = vector.extract_strided_slice %35 {offsets = [0, 0], sizes = [2, 32], strides = [1, 1]} : vector<4x32xf32> to vector<2x32xf32>
      %37 = vector.extract_strided_slice %35 {offsets = [2, 0], sizes = [2, 32], strides = [1, 1]} : vector<4x32xf32> to vector<2x32xf32>
      %38 = arith.addf %36, %37 : vector<2x32xf32>
      %39 = arith.negf %38 : vector<2x32xf32>
      %40 = math.exp %39 : vector<2x32xf32>
      %cst_33 = arith.constant 1.000000e+00 : f32
      %41 = vector.broadcast %cst_33 : f32 to vector<2x32xf32>
      %42 = arith.addf %41, %40 : vector<2x32xf32>
      %43 = arith.divf %41, %42 : vector<2x32xf32>
      %c0_34 = arith.constant 0 : index
      %c0_35 = arith.constant 0 : index
      %44 = vector.load %arg5[%c0_34, %c0_35] : memref<2x32xf32, #tpu.memory_space<vmem>>, vector<2x32xf32>
      tpu.vector_store %arg5[%c0_34, %c0_35], %43 {strides = array<i32>} : memref<2x32xf32, #tpu.memory_space<vmem>>, vector<2x32xf32>,
    } else {
    }
    return
  }
  func.func @transform_0(%arg0: i32, %arg1: i32) -> (i32, i32, i32) {
    %c0_i32 = arith.constant 0 : i32
    %c0_i32_0 = arith.constant 0 : i32
    return %arg0, %c0_i32, %arg1 : i32, i32, i32
  }
  func.func @transform_1(%arg0: i32, %arg1: i32) -> (i32, i32) {
    %c0_i32 = arith.constant 0 : i32
    %c0_i32_0 = arith.constant 0 : i32
    %c0_i32_1 = arith.constant 0 : i32
    return %c0_i32, %c0_i32_0 : i32, i32
  }
  func.func @transform_2(%arg0: i32, %arg1: i32) -> (i32, i32) {
    %c0_i32 = arith.constant 0 : i32
    %c0_i32_0 = arith.constant 0 : i32
    %c0_i32_1 = arith.constant 0 : i32
    return %c0_i32, %c0_i32_0 : i32, i32
  }
  func.func @transform_3(%arg0: i32, %arg1: i32) -> (i32, i32) {
    %c0_i32 = arith.constant 0 : i32
    %c0_i32_0 = arith.constant 0 : i32
    return %arg0, %c0_i32 : i32, i32
  }
}

</mosaic_0001>

<llo_original>
// kernel: tpu_custom_call.1
$region0: #{tpu_custom_call.1}
  #allocation0 [shape = 'u32[]', space=smem, size = 0x4, offset = 0x4, fixed_abs, tag = 'smem constant byte address 0x4 - core index']
  #allocation1 [shape = 'u32[144,128]{1,0:T(1,128)}', space=vmem, size = 0x12000, scoped, tag = 'internal scratch']
  #allocation2 [shape = 'f32[2,32,128]{2,1,0:T(8,128)}', space=vmem, size = 0x8000, scoped, tag = 'scratch operand']
  #allocation3 [shape = 'f32[2,32,128]{2,1,0:T(8,128)}', space=vmem, size = 0x8000, scoped, tag = 'scratch operand']
  %s0 = inlined_call_operand.hbm [shape: f32[2,32,400], index: 0, kind: input, shape index: {}]
  %s1 = inlined_call_operand.vmem [shape: f32[32,2], index: 1, kind: input, shape index: {}]
  %s2 = inlined_call_operand.vmem [shape: f32[2,32], index: 2, kind: input, shape index: {}]
  %s3 = inlined_call_operand.hbm [shape: f32[2,32], index: 3, kind: output, shape index: {}]
  %s4 = sld [smem:[#allocation0]]
  $region57: #{tpu_custom_call.1} parent=0
    _
  %s6 = ssub.s32 1, %s4
  %s7 = scalar_select 0, %s6, %s4
  $region1: #{tpu_custom_call.1} parent=0
    #allocation4 [shape = 'u8[65536]{0}', space=vmem, size = 0x10000, scoped, tag = 'input window, operand 0']
    #allocation5 [shape = 's32[2]{0}', space=sflag, size = 0x8, scoped, tag = 'scoped memory for tpu_custom_call.1']
    #allocation6 [shape = 's32[2]{0}', space=sflag, size = 0x8, scoped, tag = 'scoped memory for tpu_custom_call.1']
    #allocation7 [shape = 'u8[1024]{0}', space=vmem, size = 0x400, scoped, tag = 'output window, operand 0, single buffered']
    %8 = vsyncpa [#allocation5], 0
    %s9 = scalar_lea.sflag [#allocation5], 1
    %10 = vsyncpa %s9, 0
    %11 = vsyncpa [#allocation6], 0
    loop: start=0, step=1, limit=6
    $region2: #{tpu_custom_call.1} parent=1 // loop_pre_header
      _
    $region3: #{tpu_custom_call.1} parent=1 // loop_header
      %s13 = sphi 0, %s17
      %p14 = scmp.ge.s32.totalorder %s13, 6
      %s20 = sphi 0, %s32
      %s21 = sphi 0, %s28
      %s22 = sphi 0, %s20
      %s23 = sphi 0, %s21
      %s24 = sphi 0, %s22
      %s25 = sphi 0, %s23
      %s37 = sphi 0, %s39
      %s40 = sphi 0, %s37
      %s41 = sphi 0, %s40
      %s57 = sphi 0, %s41
      %s61 = sphi 0, %s61
      %s63 = sphi 0, %s61
      %s64 = sphi 0, %s63
      %s78 = sphi 0, %s64
      %s82 = sphi 0, %s82
      %s84 = sphi 0, %s82
      %s85 = sphi 0, %s84
      %s99 = sphi 0, %s85
      %s105 = sphi 0, %s107
      %s108 = sphi 0, %s105
      %s109 = sphi 0, %s108
      %s125 = sphi 0, %s109
    $region4: #{tpu_custom_call.1} parent=1 // loop_header_branch
      %16 = sbr.rel (%p14) target = $region8
    $region5: #{tpu_custom_call.1} parent=1 // loop_body
      %s18 = ssub.s32 %s13, 1
      %s19 = ssub.s32 %s13, 2
      %s26 = sadd.s32 1, %s21
      %p27 = scmp.ge.s32.totalorder %s26, 4
      %s28 = scalar_select %p27, 0, %s26
      %s29 = sadd.s32 1, %s20
      %s30 = scalar_select %p27, %s29, %s20
      %p31 = scmp.ge.s32.totalorder %s30, 1
      %s32 = scalar_select %p31, 0, %s30
      %s33 = ssub.s32 %s20, %s32
      %s34 = ssub.s32 %s21, %s28
      %s35 = sor.u32 %s33, %s34
      %p36 = scmp.eq.s32.totalorder %s35, 0
      %s38 = sadd.s32 %s37, 1
      %s39 = scalar_select %p36, %s37, %s38
      %p42 = pneg %p36
      %p43 = scmp.eq.s32.totalorder %s13, 3
      %p44 = por %p42, %p43
      %p45 = scmp.ne.s32.totalorder %s37, %s40
      %p46 = scmp.eq.s32.totalorder %s13, 0
      %p47 = por %p45, %p46
      %p48 = scmp.ne.s32.totalorder %s37, %s40
      %p49 = scmp.eq.s32.totalorder %s18, 3
      %p50 = por %p48, %p49
      %p51 = scmp.ne.s32.totalorder %s40, %s41
      %p52 = scmp.eq.s32.totalorder %s18, 0
      %p53 = por %p51, %p52
      %p54 = scmp.ne.s32.totalorder %s40, %s41
      %p55 = scmp.eq.s32.totalorder %s19, 3
      %p56 = por %p54, %p55
      %p58 = scmp.ne.s32.totalorder %s41, %s57
      %p59 = scmp.eq.s32.totalorder %s19, 0
      %p60 = por %p58, %p59
      %s62 = sadd.s32 %s61, 1
      %p65 = scmp.eq.s32.totalorder %s13, 3
      %p66 = scmp.ne.s32.totalorder %s61, %s63
      %p67 = scmp.eq.s32.totalorder %s13, 0
      %p68 = por %p66, %p67
      %p69 = scmp.ne.s32.totalorder %s61, %s63
      %p70 = scmp.eq.s32.totalorder %s18, 3
      %p71 = por %p69, %p70
      %p72 = scmp.ne.s32.totalorder %s63, %s64
      %p73 = scmp.eq.s32.totalorder %s18, 0
      %p74 = por %p72, %p73
      %p75 = scmp.ne.s32.totalorder %s63, %s64
      %p76 = scmp.eq.s32.totalorder %s19, 3
      %p77 = por %p75, %p76
      %p79 = scmp.ne.s32.totalorder %s64, %s78
      %p80 = scmp.eq.s32.totalorder %s19, 0
      %p81 = por %p79, %p80
      %s83 = sadd.s32 %s82, 1
      %p86 = scmp.eq.s32.totalorder %s13, 3
      %p87 = scmp.ne.s32.totalorder %s82, %s84
      %p88 = scmp.eq.s32.totalorder %s13, 0
      %p89 = por %p87, %p88
      %p90 = scmp.ne.s32.totalorder %s82, %s84
      %p91 = scmp.eq.s32.totalorder %s18, 3
      %p92 = por %p90, %p91
      %p93 = scmp.ne.s32.totalorder %s84, %s85
      %p94 = scmp.eq.s32.totalorder %s18, 0
      %p95 = por %p93, %p94
      %p96 = scmp.ne.s32.totalorder %s84, %s85
      %p97 = scmp.eq.s32.totalorder %s19, 3
      %p98 = por %p96, %p97
      %p100 = scmp.ne.s32.totalorder %s85, %s99
      %p101 = scmp.eq.s32.totalorder %s19, 0
      %p102 = por %p100, %p101
      %s103 = ssub.s32 %s20, %s32
      %p104 = scmp.eq.s32.totalorder %s103, 0
      %s106 = sadd.s32 %s105, 1
      %s107 = scalar_select %p104, %s105, %s106
      %p110 = pneg %p104
      %p111 = scmp.eq.s32.totalorder %s13, 3
      %p112 = por %p110, %p111
      %p113 = scmp.ne.s32.totalorder %s105, %s108
      %p114 = scmp.eq.s32.totalorder %s13, 0
      %p115 = por %p113, %p114
      %p116 = scmp.ne.s32.totalorder %s105, %s108
      %p117 = scmp.eq.s32.totalorder %s18, 3
      %p118 = por %p116, %p117
      %p119 = scmp.ne.s32.totalorder %s108, %s109
      %p120 = scmp.eq.s32.totalorder %s18, 0
      %p121 = por %p119, %p120
      %p122 = scmp.ne.s32.totalorder %s108, %s109
      %p123 = scmp.eq.s32.totalorder %s19, 3
      %p124 = por %p122, %p123
      %p126 = scmp.ne.s32.totalorder %s109, %s125
      %p127 = scmp.eq.s32.totalorder %s19, 0
      %p128 = por %p126, %p127
      %p129 = scmp.le.s32.totalorder 1, %s13
      %p130 = scmp.lt.s32.totalorder %s13, 5
      %p131 = pnand %p129, %p130
      %p132 = pneg %p131
      // Predicated region
      $region9: #{tpu_custom_call.1} parent=5 // pred_check
        _
      $region10: #{tpu_custom_call.1} parent=5 // pred_check_branch
        %134 = sbr.rel (%p131) target = $region12
      $region11: #{tpu_custom_call.1} parent=5 // pred_region
        %s135 = ssub.s32 %s13, 1
        // Predicated region
        $region13: #{tpu_custom_call.1} parent=11 // pred_check
          %p136 = pneg %p74
        $region14: #{tpu_custom_call.1} parent=11 // pred_check_branch
          %138 = sbr.rel (%p136) target = $region16
        $region15: #{tpu_custom_call.1} parent=11 // pred_region
          _
        $region16: #{tpu_custom_call.1} parent=11 // pred_fallthru
          _
        // Predicated region
        $region17: #{tpu_custom_call.1} parent=11 // pred_check
          %p139 = pneg %p95
        $region18: #{tpu_custom_call.1} parent=11 // pred_check_branch
          %141 = sbr.rel (%p139) target = $region20
        $region19: #{tpu_custom_call.1} parent=11 // pred_region
          _
        $region20: #{tpu_custom_call.1} parent=11 // pred_fallthru
          _
      $region12: #{tpu_custom_call.1} parent=5 // pred_fallthru
        _
      %p142 = scmp.lt.s32.totalorder %s13, 4
      // Predicated region
      $region21: #{tpu_custom_call.1} parent=5 // pred_check
        %p143 = pneg %p142
      $region22: #{tpu_custom_call.1} parent=5 // pred_check_branch
        %145 = sbr.rel (%p143) target = $region24
      $region23: #{tpu_custom_call.1} parent=5 // pred_region
        // Predicated region
        $region25: #{tpu_custom_call.1} parent=23 // pred_check
          %p146 = pneg %p47
        $region26: #{tpu_custom_call.1} parent=23 // pred_check_branch
          %148 = sbr.rel (%p146) target = $region28
        $region27: #{tpu_custom_call.1} parent=23 // pred_region
          %s149 = sand.u32 %s37, 1
          %s150 = scalar_lea.sflag [#allocation5], %s149
          %s151 = sand.u32 %s37, 1
          %s152 = smul.addr %s151, 64
          %s153 = scalar_lea.vmem [#allocation4], %s152
          %s154 = smul.u32 2, %s20
          %s156 = ssub.s32 1024, 1024
          %157 = vsyncadd %s150, %s156
          %s158 = smul.addr %s154, 16
          %s159 = sadd.s32 %s21, %s158
          %s160 = smul.addr %s159, 128
          %s161 = scalar_lea.hbm %s0, %s160
          %s162 = sshll.u32 %s153, 4
          %s163 = int_to_ptr.vmem [resolvable:$true] %s162
          %168 = dma.hbm_to_vmem [thread:$0]  %s161, 1024, %s163, %s150, 512, 128, 8
        $region28: #{tpu_custom_call.1} parent=23 // pred_fallthru
          _
      $region24: #{tpu_custom_call.1} parent=5 // pred_fallthru
        _
      %p169 = scmp.le.s32.totalorder 1, %s13
      %p170 = scmp.lt.s32.totalorder %s13, 5
      %p171 = pnand %p169, %p170
      %p172 = pneg %p171
      // Predicated region
      $region29: #{tpu_custom_call.1} parent=5 // pred_check
        _
      $region30: #{tpu_custom_call.1} parent=5 // pred_check_branch
        %174 = sbr.rel (%p171) target = $region32
      $region31: #{tpu_custom_call.1} parent=5 // pred_region
        %s175 = ssub.s32 %s13, 1
        %s176 = sand.u32 %s40, 1
        %s177 = scalar_lea.sflag [#allocation5], %s176
        %s178 = sand.u32 %s40, 1
        %s179 = smul.addr %s178, 64
        %s180 = scalar_lea.vmem [#allocation4], %s179
        // Predicated region
        $region33: #{tpu_custom_call.1} parent=31 // pred_check
          %p181 = pneg %p53
        $region34: #{tpu_custom_call.1} parent=31 // pred_check_branch
          %183 = sbr.rel (%p181) target = $region36
        $region35: #{tpu_custom_call.1} parent=31 // pred_region
          %184 = dma.done %s177, 1024
        $region36: #{tpu_custom_call.1} parent=31 // pred_fallthru
          _
        %s185 = sand.u32 %s40, 1
        %s186 = scalar_lea.sflag [#allocation5], %s185
        %s187 = sand.u32 %s40, 1
        %s188 = smul.addr %s187, 64
        %s189 = scalar_lea.vmem [#allocation4], %s188
        %p190 = pneg %p53
        %p191 = pneg %p50
        %p192 = pneg %p74
        %p193 = pneg %p71
        %p194 = pneg %p95
        %p195 = pneg %p92
        %p196 = pneg %p121
        %p197 = pneg %p118
        %s198 = smul.u32 2, %s22
        %p199 = scmp.eq.s32.totalorder %s23, 0
        // Predicated region
        $region37: #{tpu_custom_call.1} parent=31 // pred_check
          %p200 = pneg %p199
        $region38: #{tpu_custom_call.1} parent=31 // pred_check_branch
          %202 = sbr.rel (%p200) target = $region40
        $region39: #{tpu_custom_call.1} parent=31 // pred_region
          %203 = vst [vmem:[#allocation2] sm:$0xff] 0.0
          %204 = vst [vmem:[#allocation2 + $0x8] sm:$0xff] 0.0
          %205 = vst [vmem:[#allocation2 + $0x10] sm:$0xff] 0.0
          %206 = vst [vmem:[#allocation2 + $0x18] sm:$0xff] 0.0
          %207 = vst [vmem:[#allocation2 + $0x20] sm:$0xff] 0.0
          %208 = vst [vmem:[#allocation2 + $0x28] sm:$0xff] 0.0
          %209 = vst [vmem:[#allocation2 + $0x30] sm:$0xff] 0.0
          %210 = vst [vmem:[#allocation2 + $0x38] sm:$0xff] 0.0
          %211 = vst [vmem:[#allocation3] sm:$0xff] -inf
          %212 = vst [vmem:[#allocation3 + $0x8] sm:$0xff] -inf
          %213 = vst [vmem:[#allocation3 + $0x10] sm:$0xff] -inf
          %214 = vst [vmem:[#allocation3 + $0x18] sm:$0xff] -inf
          %215 = vst [vmem:[#allocation3 + $0x20] sm:$0xff] -inf
          %216 = vst [vmem:[#allocation3 + $0x28] sm:$0xff] -inf
          %217 = vst [vmem:[#allocation3 + $0x30] sm:$0xff] -inf
          %218 = vst [vmem:[#allocation3 + $0x38] sm:$0xff] -inf
        $region40: #{tpu_custom_call.1} parent=31 // pred_fallthru
          _
        %v219 = vld [vmem:[%s180] sm:$0xff]
        %v220 = vld [vmem:[%s180 + $0x8] sm:$0xff]
        %v221 = vld [vmem:[%s180 + $0x10] sm:$0xff]
        %v222 = vld [vmem:[%s180 + $0x18] sm:$0xff]
        %v223 = vld [vmem:[%s180 + $0x20] sm:$0xff]
        %v224 = vld [vmem:[%s180 + $0x28] sm:$0xff]
        %v225 = vld [vmem:[%s180 + $0x30] sm:$0xff]
        %v226 = vld [vmem:[%s180 + $0x38] sm:$0xff]
        %v227 = vlaneseq
        %v228 = vand.u32 %v227, 127
        %s229 = smul.u32 %s23, 128
        %v230 = vstv %s229
        %v231 = vadd.s32 %v230, %v228
        %vm232 = vcmp.lt.s32.totalorder %v231, 400
        %v233 = vsel %vm232, %v219, 0.0
        %v234 = vsel %vm232, %v220, 0.0
        %v235 = vsel %vm232, %v221, 0.0
        %v236 = vsel %vm232, %v222, 0.0
        %v237 = vsel %vm232, %v223, 0.0
        %v238 = vsel %vm232, %v224, 0.0
        %v239 = vsel %vm232, %v225, 0.0
        %v240 = vsel %vm232, %v226, 0.0
        %v241 = vsel %vm232, %v219, -inf
        %v242 = vsel %vm232, %v220, -inf
        %v243 = vsel %vm232, %v221, -inf
        %v244 = vsel %vm232, %v222, -inf
        %v245 = vsel %vm232, %v223, -inf
        %v246 = vsel %vm232, %v224, -inf
        %v247 = vsel %vm232, %v225, -inf
        %v248 = vsel %vm232, %v226, -inf
        %v249 = vld [vmem:[#allocation2] sm:$0xff]
        %v250 = vld [vmem:[#allocation2 + $0x8] sm:$0xff]
        %v251 = vld [vmem:[#allocation2 + $0x10] sm:$0xff]
        %v252 = vld [vmem:[#allocation2 + $0x18] sm:$0xff]
        %v253 = vld [vmem:[#allocation2 + $0x20] sm:$0xff]
        %v254 = vld [vmem:[#allocation2 + $0x28] sm:$0xff]
        %v255 = vld [vmem:[#allocation2 + $0x30] sm:$0xff]
        %v256 = vld [vmem:[#allocation2 + $0x38] sm:$0xff]
        %v257 = vadd.f32 %v249, %v233
        %v258 = vadd.f32 %v250, %v234
        %v259 = vadd.f32 %v251, %v235
        %v260 = vadd.f32 %v252, %v236
        %v261 = vadd.f32 %v253, %v237
        %v262 = vadd.f32 %v254, %v238
        %v263 = vadd.f32 %v255, %v239
        %v264 = vadd.f32 %v256, %v240
        %265 = vst [vmem:[#allocation2] sm:$0xff] %v257
        %266 = vst [vmem:[#allocation2 + $0x8] sm:$0xff] %v258
        %267 = vst [vmem:[#allocation2 + $0x10] sm:$0xff] %v259
        %268 = vst [vmem:[#allocation2 + $0x18] sm:$0xff] %v260
        %269 = vst [vmem:[#allocation2 + $0x20] sm:$0xff] %v261
        %270 = vst [vmem:[#allocation2 + $0x28] sm:$0xff] %v262
        %271 = vst [vmem:[#allocation2 + $0x30] sm:$0xff] %v263
        %272 = vst [vmem:[#allocation2 + $0x38] sm:$0xff] %v264
        %v273 = vld [vmem:[#allocation3] sm:$0xff]
        %v274 = vld [vmem:[#allocation3 + $0x8] sm:$0xff]
        %v275 = vld [vmem:[#allocation3 + $0x10] sm:$0xff]
        %v276 = vld [vmem:[#allocation3 + $0x18] sm:$0xff]
        %v277 = vld [vmem:[#allocation3 + $0x20] sm:$0xff]
        %v278 = vld [vmem:[#allocation3 + $0x28] sm:$0xff]
        %v279 = vld [vmem:[#allocation3 + $0x30] sm:$0xff]
        %v280 = vld [vmem:[#allocation3 + $0x38] sm:$0xff]
        %v281 = vmax.f32 %v273, %v241
        %v282 = vmax.f32 %v274, %v242
        %v283 = vmax.f32 %v275, %v243
        %v284 = vmax.f32 %v276, %v244
        %v285 = vmax.f32 %v277, %v245
        %v286 = vmax.f32 %v278, %v246
        %v287 = vmax.f32 %v279, %v247
        %v288 = vmax.f32 %v280, %v248
        %289 = vst [vmem:[#allocation3] sm:$0xff] %v281
        %290 = vst [vmem:[#allocation3 + $0x8] sm:$0xff] %v282
        %291 = vst [vmem:[#allocation3 + $0x10] sm:$0xff] %v283
        %292 = vst [vmem:[#allocation3 + $0x18] sm:$0xff] %v284
        %293 = vst [vmem:[#allocation3 + $0x20] sm:$0xff] %v285
        %294 = vst [vmem:[#allocation3 + $0x28] sm:$0xff] %v286
        %295 = vst [vmem:[#allocation3 + $0x30] sm:$0xff] %v287
        %296 = vst [vmem:[#allocation3 + $0x38] sm:$0xff] %v288
        %p297 = scmp.eq.s32.totalorder %s23, 3
        // Predicated region
        $region41: #{tpu_custom_call.1} parent=31 // pred_check
          %p298 = pneg %p297
        $region42: #{tpu_custom_call.1} parent=31 // pred_check_branch
          %300 = sbr.rel (%p298) target = $region44
        $region43: #{tpu_custom_call.1} parent=31 // pred_region
          %v301 = vld [vmem:[#allocation2] sm:$0xff]
          %v302 = vld [vmem:[#allocation2 + $0x8] sm:$0xff]
          %v303 = vld [vmem:[#allocation2 + $0x10] sm:$0xff]
          %v304 = vld [vmem:[#allocation2 + $0x18] sm:$0xff]
          %v305 = vld [vmem:[#allocation2 + $0x20] sm:$0xff]
          %v306 = vld [vmem:[#allocation2 + $0x28] sm:$0xff]
          %v307 = vld [vmem:[#allocation2 + $0x30] sm:$0xff]
          %v308 = vld [vmem:[#allocation2 + $0x38] sm:$0xff]
          %309 = vadd.xlane.f32.xlu0 %v301
          %v310 = vpop.xlane.xlu0 %309
          %311 = vadd.xlane.f32.xlu0 %v302
          %v312 = vpop.xlane.xlu0 %311
          %313 = vadd.xlane.f32.xlu0 %v303
          %v314 = vpop.xlane.xlu0 %313
          %315 = vadd.xlane.f32.xlu0 %v304
          %v316 = vpop.xlane.xlu0 %315
          %317 = vadd.xlane.f32.xlu0 %v305
          %v318 = vpop.xlane.xlu0 %317
          %319 = vadd.xlane.f32.xlu0 %v306
          %v320 = vpop.xlane.xlu0 %319
          %321 = vadd.xlane.f32.xlu0 %v307
          %v322 = vpop.xlane.xlu0 %321
          %323 = vadd.xlane.f32.xlu0 %v308
          %v324 = vpop.xlane.xlu0 %323
          %v325 = vmul.f32 %v310, 0.0025
          %v326 = vmul.f32 %v312, 0.0025
          %v327 = vmul.f32 %v314, 0.0025
          %v328 = vmul.f32 %v316, 0.0025
          %v329 = vmul.f32 %v318, 0.0025
          %v330 = vmul.f32 %v320, 0.0025
          %v331 = vmul.f32 %v322, 0.0025
          %v332 = vmul.f32 %v324, 0.0025
          %v333 = vld [vmem:[#allocation3] sm:$0xff]
          %v334 = vld [vmem:[#allocation3 + $0x8] sm:$0xff]
          %v335 = vld [vmem:[#allocation3 + $0x10] sm:$0xff]
          %v336 = vld [vmem:[#allocation3 + $0x18] sm:$0xff]
          %v337 = vld [vmem:[#allocation3 + $0x20] sm:$0xff]
          %v338 = vld [vmem:[#allocation3 + $0x28] sm:$0xff]
          %v339 = vld [vmem:[#allocation3 + $0x30] sm:$0xff]
          %v340 = vld [vmem:[#allocation3 + $0x38] sm:$0xff]
          %341 = vmax.xlane.f32.xlu0 %v333
          %v342 = vpop.xlane.xlu0 %341
          %343 = vmax.xlane.f32.xlu0 %v334
          %v344 = vpop.xlane.xlu0 %343
          %345 = vmax.xlane.f32.xlu0 %v335
          %v346 = vpop.xlane.xlu0 %345
          %347 = vmax.xlane.f32.xlu0 %v336
          %v348 = vpop.xlane.xlu0 %347
          %349 = vmax.xlane.f32.xlu0 %v337
          %v350 = vpop.xlane.xlu0 %349
          %351 = vmax.xlane.f32.xlu0 %v338
          %v352 = vpop.xlane.xlu0 %351
          %353 = vmax.xlane.f32.xlu0 %v339
          %v354 = vpop.xlane.xlu0 %353
          %355 = vmax.xlane.f32.xlu0 %v340
          %v356 = vpop.xlane.xlu0 %355
          %v365 = vlaneseq
          %v366 = vshrl.u32 %v365, 7
          %v367 = vsub.s32 %v228, %v366
          %v368 = vrot.slane %v325, %v367
          %v369 = vadd.s32 %v228, 4294967288
          %v370 = vlaneseq
          %v371 = vshrl.u32 %v370, 7
          %v372 = vsub.s32 %v369, %v371
          %v373 = vrot.slane %v326, %v372
          %vm374 = vcmask 130112
          %v375 = vsel %vm374, %v373, %v368
          %v376 = vadd.s32 %v228, 4294967280
          %v377 = vlaneseq
          %v378 = vshrl.u32 %v377, 7
          %v379 = vsub.s32 %v376, %v378
          %v380 = vrot.slane %v327, %v379
          %vm381 = vcmask 195712
          %v382 = vsel %vm381, %v380, %v375
          %v383 = vadd.s32 %v228, 4294967272
          %v384 = vlaneseq
          %v385 = vshrl.u32 %v384, 7
          %v386 = vsub.s32 %v383, %v385
          %v387 = vrot.slane %v328, %v386
          %vm388 = vcmask 261312
          %v389 = vsel %vm388, %v387, %v382
          %v390 = vlaneseq
          %v391 = vshrl.u32 %v390, 7
          %v392 = vsub.s32 %v228, %v391
          %v393 = vrot.slane %v329, %v392
          %v394 = vlaneseq
          %v395 = vshrl.u32 %v394, 7
          %v396 = vsub.s32 %v369, %v395
          %v397 = vrot.slane %v330, %v396
          %v398 = vsel %vm374, %v397, %v393
          %v399 = vlaneseq
          %v400 = vshrl.u32 %v399, 7
          %v401 = vsub.s32 %v376, %v400
          %v402 = vrot.slane %v331, %v401
          %v403 = vsel %vm381, %v402, %v398
          %v404 = vlaneseq
          %v405 = vshrl.u32 %v404, 7
          %v406 = vsub.s32 %v383, %v405
          %v407 = vrot.slane %v332, %v406
          %v408 = vsel %vm388, %v407, %v403
          %vm409 = vcmask 1041409
          %v410 = vsel %vm409, %v408, %v389
          %v420 = vlaneseq
          %v421 = vshrl.u32 %v420, 7
          %v422 = vsub.s32 %v228, %v421
          %v423 = vrot.slane %v342, %v422
          %v424 = vlaneseq
          %v425 = vshrl.u32 %v424, 7
          %v426 = vsub.s32 %v369, %v425
          %v427 = vrot.slane %v344, %v426
          %v428 = vsel %vm374, %v427, %v423
          %v429 = vlaneseq
          %v430 = vshrl.u32 %v429, 7
          %v431 = vsub.s32 %v376, %v430
          %v432 = vrot.slane %v346, %v431
          %v433 = vsel %vm381, %v432, %v428
          %v434 = vlaneseq
          %v435 = vshrl.u32 %v434, 7
          %v436 = vsub.s32 %v383, %v435
          %v437 = vrot.slane %v348, %v436
          %v438 = vsel %vm388, %v437, %v433
          %v439 = vlaneseq
          %v440 = vshrl.u32 %v439, 7
          %v441 = vsub.s32 %v228, %v440
          %v442 = vrot.slane %v350, %v441
          %v443 = vlaneseq
          %v444 = vshrl.u32 %v443, 7
          %v445 = vsub.s32 %v369, %v444
          %v446 = vrot.slane %v352, %v445
          %v447 = vsel %vm374, %v446, %v442
          %v448 = vlaneseq
          %v449 = vshrl.u32 %v448, 7
          %v450 = vsub.s32 %v376, %v449
          %v451 = vrot.slane %v354, %v450
          %v452 = vsel %vm381, %v451, %v447
          %v453 = vlaneseq
          %v454 = vshrl.u32 %v453, 7
          %v455 = vsub.s32 %v383, %v454
          %v456 = vrot.slane %v356, %v455
          %v457 = vsel %vm388, %v456, %v452
          %vm458 = vcmask 1043459
          %v459 = vsel %vm458, %v457, %v438
          %vm461 = vcmask 1041408
          %v462 = vsel %vm461, %v410, %v459
          %v463 = vld [vmem:[%s1] sm:$0xff]
          %v464 = vld [vmem:[%s1 + $0x8] sm:$0xff]
          %v465 = vld [vmem:[%s1 + $0x10] sm:$0xff]
          %v466 = vld [vmem:[%s1 + $0x18] sm:$0xff]
          %vm467 = vcmask 261120
          %v469 = vsel %vm467, %v462, 0
          %471 = vmatprep.subr.mxu0 0.0
          %472 = vmatpush1.msra.mxu0 %v463
          %473 = vmatprep.subr.mxu0 0.0
          %474 = vmatpush1.msra.mxu0 %v464
          %475 = vmatprep.subr.mxu0 0.0
          %476 = vmatpush1.msra.mxu0 %v465
          %477 = vmatprep.subr.mxu0 0.0
          %478 = vmatpush1.msra.mxu0 %v466
          %479 = vmatprep.subr.mxu0 0.0
          %480 = vmatpush1.msra.mxu0 0.0
          %481 = vmatprep.subr.mxu0 0.0
          %482 = vmatpush1.msra.mxu0 0.0
          %483 = vmatprep.subr.mxu0 0.0
          %484 = vmatpush1.msra.mxu0 0.0
          %485 = vmatprep.subr.mxu0 0.0
          %486 = vmatpush1.msra.mxu0 0.0
          %487 = vmatprep.subr.mxu0 0.0
          %488 = vmatpush1.msra.mxu0 0.0
          %489 = vmatprep.subr.mxu0 0.0
          %490 = vmatpush1.msra.mxu0 0.0
          %491 = vmatprep.subr.mxu0 0.0
          %492 = vmatpush1.msra.mxu0 0.0
          %493 = vmatprep.subr.mxu0 0.0
          %494 = vmatpush1.msra.mxu0 0.0
          %495 = vmatprep.subr.mxu0 0.0
          %496 = vmatpush1.msra.mxu0 0.0
          %497 = vmatprep.subr.mxu0 0.0
          %498 = vmatpush1.msra.mxu0 0.0
          %499 = vmatprep.subr.mxu0 0.0
          %500 = vmatpush1.msra.mxu0 0.0
          %501 = vmatprep.subr.mxu0 0.0
          %502 = vmatpush1.msra.mxu0 0.0
          %503 = vmatprep.subr.mxu0 0.0
          %504 = vmatpush1.msra.mxu0 0.0
          %505 = vmatprep.subr.mxu0 0.0
          %506 = vmatpush1.msra.mxu0 0.0
          %507 = vmatprep.subr.mxu0 0.0
          %508 = vmatpush1.msra.mxu0 0.0
          %509 = vmatprep.subr.mxu0 0.0
          %510 = vmatpush1.msra.mxu0 0.0
          %511 = vmatprep.subr.mxu0 0.0
          %512 = vmatpush1.msra.mxu0 0.0
          %513 = vmatprep.subr.mxu0 0.0
          %514 = vmatpush1.msra.mxu0 0.0
          %515 = vmatprep.subr.mxu0 0.0
          %516 = vmatpush1.msra.mxu0 0.0
          %517 = vmatprep.subr.mxu0 0.0
          %518 = vmatpush1.msra.mxu0 0.0
          %519 = vmatprep.subr.mxu0 0.0
          %520 = vmatpush1.msra.mxu0 0.0
          %521 = vmatprep.subr.mxu0 0.0
          %522 = vmatpush1.msra.mxu0 0.0
          %523 = vmatprep.subr.mxu0 0.0
          %524 = vmatpush1.msra.mxu0 0.0
          %525 = vmatprep.subr.mxu0 0.0
          %526 = vmatpush1.msra.mxu0 0.0
          %527 = vmatprep.subr.mxu0 0.0
          %528 = vmatpush1.msra.mxu0 0.0
          %529 = vmatprep.subr.mxu0 0.0
          %530 = vmatpush1.msra.mxu0 0.0
          %531 = vmatprep.subr.mxu0 0.0
          %532 = vmatpush1.msra.mxu0 0.0
          %533 = vmatprep.subr.mxu0 0.0
          %534 = vmatpush1.msra.mxu0 0.0
          %535 = vmatprep.mubr.f32.mxu0 0.0
          %536 = vmatmul.mubr.f32.gmra.mrb[0].mxu0 %v469
          %v537 = vpop.f32.mrb[0].mxu0
          %v538 = vadd.f32 0.0, %v537
          %v539 = vpop.f32.mrb[0].mxu0
          %540 = vdwg.mxu0
          %v541 = vmax.f32 %v538, 0.0
          %v542 = vld [vmem:[%s2] sm:$0x3]
          %vm543 = vcmask 15360
          %v545 = vsel %vm543, %v541, 0
          %v548 = vsel %vm461, %v542, 0
          %550 = vmatprep.subr.mxu0 0.0
          %551 = vmatpush1.msra.mxu0 %v548
          %552 = vmatprep.subr.mxu0 0.0
          %553 = vmatpush1.msra.mxu0 0.0
          %554 = vmatprep.subr.mxu0 0.0
          %555 = vmatpush1.msra.mxu0 0.0
          %556 = vmatprep.subr.mxu0 0.0
          %557 = vmatpush1.msra.mxu0 0.0
          %558 = vmatprep.subr.mxu0 0.0
          %559 = vmatpush1.msra.mxu0 0.0
          %560 = vmatprep.subr.mxu0 0.0
          %561 = vmatpush1.msra.mxu0 0.0
          %562 = vmatprep.subr.mxu0 0.0
          %563 = vmatpush1.msra.mxu0 0.0
          %564 = vmatprep.subr.mxu0 0.0
          %565 = vmatpush1.msra.mxu0 0.0
          %566 = vmatprep.subr.mxu0 0.0
          %567 = vmatpush1.msra.mxu0 0.0
          %568 = vmatprep.subr.mxu0 0.0
          %569 = vmatpush1.msra.mxu0 0.0
          %570 = vmatprep.subr.mxu0 0.0
          %571 = vmatpush1.msra.mxu0 0.0
          %572 = vmatprep.subr.mxu0 0.0
          %573 = vmatpush1.msra.mxu0 0.0
          %574 = vmatprep.subr.mxu0 0.0
          %575 = vmatpush1.msra.mxu0 0.0
          %576 = vmatprep.subr.mxu0 0.0
          %577 = vmatpush1.msra.mxu0 0.0
          %578 = vmatprep.subr.mxu0 0.0
          %579 = vmatpush1.msra.mxu0 0.0
          %580 = vmatprep.subr.mxu0 0.0
          %581 = vmatpush1.msra.mxu0 0.0
          %582 = vmatprep.subr.mxu0 0.0
          %583 = vmatpush1.msra.mxu0 0.0
          %584 = vmatprep.subr.mxu0 0.0
          %585 = vmatpush1.msra.mxu0 0.0
          %586 = vmatprep.subr.mxu0 0.0
          %587 = vmatpush1.msra.mxu0 0.0
          %588 = vmatprep.subr.mxu0 0.0
          %589 = vmatpush1.msra.mxu0 0.0
          %590 = vmatprep.subr.mxu0 0.0
          %591 = vmatpush1.msra.mxu0 0.0
          %592 = vmatprep.subr.mxu0 0.0
          %593 = vmatpush1.msra.mxu0 0.0
          %594 = vmatprep.subr.mxu0 0.0
          %595 = vmatpush1.msra.mxu0 0.0
          %596 = vmatprep.subr.mxu0 0.0
          %597 = vmatpush1.msra.mxu0 0.0
          %598 = vmatprep.subr.mxu0 0.0
          %599 = vmatpush1.msra.mxu0 0.0
          %600 = vmatprep.subr.mxu0 0.0
          %601 = vmatpush1.msra.mxu0 0.0
          %602 = vmatprep.subr.mxu0 0.0
          %603 = vmatpush1.msra.mxu0 0.0
          %604 = vmatprep.subr.mxu0 0.0
          %605 = vmatpush1.msra.mxu0 0.0
          %606 = vmatprep.subr.mxu0 0.0
          %607 = vmatpush1.msra.mxu0 0.0
          %608 = vmatprep.subr.mxu0 0.0
          %609 = vmatpush1.msra.mxu0 0.0
          %610 = vmatprep.subr.mxu0 0.0
          %611 = vmatpush1.msra.mxu0 0.0
          %612 = vmatprep.subr.mxu0 0.0
          %613 = vmatpush1.msra.mxu0 0.0
          %614 = vmatprep.mubr.f32.mxu0 0.0
          %615 = vmatmul.mubr.f32.gmra.mrb[0].mxu0 %v545
          %v616 = vpop.f32.mrb[0].mxu0
          %v617 = vadd.f32 0.0, %v616
          %v618 = vpop.f32.mrb[0].mxu0
          %619 = vdwg.mxu0
          %v621 = vrot.slane %v617, 2
          %v623 = vadd.f32 %v617, %v621
          %v624 = vxor.u32 %v623, 2147483648
          %v625 = vmul.f32 %v624, 1.442695
          %v626 = vpow.pop %v625
          %v627 = vadd.f32 %v626, 1.0
          %v628 = vrcp.pop %v627
          %v629 = vmul.f32 1.0, %v628
          %vm630 = vcmask 254976
          %631 = vst.msk [vmem:[#allocation7] sm:$0x3] %vm630, %v629
        $region44: #{tpu_custom_call.1} parent=31 // pred_fallthru
          _
        // Predicated region
        $region45: #{tpu_custom_call.1} parent=31 // pred_check
          %p632 = pneg %p118
        $region46: #{tpu_custom_call.1} parent=31 // pred_check_branch
          %634 = sbr.rel (%p632) target = $region48
        $region47: #{tpu_custom_call.1} parent=31 // pred_region
          %s636 = ssub.s32 32, 32
          %637 = vsyncadd [#allocation6], %s636
          %s638 = smul.addr %s22, 32
          %s639 = scalar_lea.hbm %s3, %s638
          %s641 = sshll.u32 [#allocation7], 4
          %s642 = int_to_ptr.vmem [resolvable:$true] %s641
          %644 = dma.vmem_to_hbm [thread:$0]  %s642, 32, %s639, [#allocation6]
        $region48: #{tpu_custom_call.1} parent=31 // pred_fallthru
          _
        // Predicated region
        $region49: #{tpu_custom_call.1} parent=31 // pred_check
          %p645 = pneg %p118
        $region50: #{tpu_custom_call.1} parent=31 // pred_check_branch
          %647 = sbr.rel (%p645) target = $region52
        $region51: #{tpu_custom_call.1} parent=31 // pred_region
          %648 = dma.done [#allocation6], 32
        $region52: #{tpu_custom_call.1} parent=31 // pred_fallthru
          _
      $region32: #{tpu_custom_call.1} parent=5 // pred_fallthru
        _
      %p649 = scmp.le.s32.totalorder 2, %s13
      // Predicated region
      $region53: #{tpu_custom_call.1} parent=5 // pred_check
        %p650 = pneg %p649
      $region54: #{tpu_custom_call.1} parent=5 // pred_check_branch
        %652 = sbr.rel (%p650) target = $region56
      $region55: #{tpu_custom_call.1} parent=5 // pred_region
        %s653 = ssub.s32 %s13, 2
      $region56: #{tpu_custom_call.1} parent=5 // pred_fallthru
        _
    $region6: #{tpu_custom_call.1} parent=1 // loop_footer
      %s17 = sadd.s32 1, %s13
    $region7: #{tpu_custom_call.1} parent=1 // loop_footer_branch
      %12 = sbr.rel target = $region3
    $region8: #{tpu_custom_call.1} parent=1 // loop_exit
      _
    %654 = vsyncpa [#allocation5], 1
    %s655 = scalar_lea.sflag [#allocation5], 1
    %656 = vsyncpa %s655, 1
    %657 = vsyncpa [#allocation6], 1
    %s658 = scalar_lea.sflag [#allocation6], 1
    %659 = vsyncpa %s658, 1

</llo_original>
